<compile_context>
chip_gen: v5e
topology: v5e:2x2
jax: 0.10.0
libtpu: 0.0.40
codegen_flags: <defaults>
</compile_context>

<pallas_src>
import jax
import jax.numpy as jnp
from jax.experimental import pallas as pl
from jax.experimental.pallas import tpu as pltpu


def _round_up(x: int, m: int) -> int:
    return ((x + m - 1) // m) * m


def _choose_tile_b(batch: int) -> int:
    """Largest tile in (512, 256, 128) that keeps >= 2 grid tiles; tiny-batch fallback."""
    for cand in (512, 256, 128):
        if pl.cdiv(batch, cand) >= 2:
            return cand
    # Single-tile case (batch <= 128): one tile covering the whole (8-aligned) batch.
    return min(128, _round_up(batch, 8))


def _make_ensemble_mlp_kernel(n_hidden: int, compute_dtype):
    """Kernel for an MLP with `n_hidden` hidden (ReLU) layers + a final linear layer."""

    def kernel(*refs):
        # refs = (x, w0, b0, w1, b1, ..., w_last, b_last, out)
        x_ref = refs[0]
        o_ref = refs[-1]
        h = x_ref[...].astype(compute_dtype)             # (TILE_B, in) bf16 activation tile
        for i in range(n_hidden):
            w = refs[1 + 2 * i][...]                     # (in, width) bf16, VMEM-resident
            b = refs[2 + 2 * i][...]                     # (1, width)  f32
            z = jnp.dot(h, w, preferred_element_type=jnp.float32)
            # bias + relu in f32 (v5e-safe), cast once per layer to bf16.
            h = jnp.maximum(z + b, 0.0).astype(compute_dtype)
        w_last = refs[1 + 2 * n_hidden][...]
        b_last = refs[2 + 2 * n_hidden][...]
        # output_activation = identity; f32 preactivation written out.
        o_ref[...] = jnp.dot(h, w_last, preferred_element_type=jnp.float32) + b_last

    return kernel


def prep_params(params, weight_dtype=jnp.bfloat16):
    """One-time weight prep (hoisted out of the forward path): bf16 weights, f32 biases."""
    return [(w.astype(weight_dtype), b.astype(jnp.float32)) for (w, b) in params]


def ensemble_mlp_forward(x, prepped_params, num_samples, *, tile_b=None,
                         return_preactivations=False):
    """prepped_params = [(W0, b0), ..., (W_last, b_last)];
    W as (in, out) bf16 (see prep_params), b as (1, out) f32."""
    n_hidden = len(prepped_params) - 1
    batch, input_size = x.shape
    out_width = prepped_params[-1][0].shape[1]           # output_size * num_samples

    if tile_b is None:
        tile_b = _choose_tile_b(batch)
    grid = (pl.cdiv(batch, tile_b),)                     # ragged last tile handled by Pallas

    flat_inputs = [x]
    in_specs = [pl.BlockSpec((tile_b, input_size), lambda i: (i, 0))]
    for w_k, b_k in prepped_params:
        flat_inputs.append(w_k)
        flat_inputs.append(b_k)
        # Constant index_map: fetched once, stays VMEM-resident across all batch tiles.
        in_specs.append(pl.BlockSpec(w_k.shape, lambda i: (0, 0)))
        in_specs.append(pl.BlockSpec(b_k.shape, lambda i: (0, 0)))

    out_spec = pl.BlockSpec((tile_b, out_width), lambda i: (i, 0))

    # VMEM budget: resident weights/biases (x2 for default pipeline buffers) +
    # double-buffered activation/output tiles + intermediate headroom.
    resident = sum(w.size * w.dtype.itemsize + b.size * b.dtype.itemsize
                   for w, b in prepped_params)
    max_width = max(w.shape[1] for w, _ in prepped_params)
    io_tiles = 2 * (tile_b * input_size * x.dtype.itemsize + tile_b * out_width * 4)
    scratch = 4 * tile_b * max_width * 4
    vmem_limit = int(min(max(2 * resident + io_tiles + scratch + (2 << 20), 16 << 20),
                         48 << 20))  # leave headroom under v7x's 64 MiB physical VMEM

    flops = 2 * batch * sum(w.shape[0] * w.shape[1] for w, _ in prepped_params)
    bytes_accessed = (x.size * x.dtype.itemsize + resident
                      + batch * out_width * 4)
    cost = pl.CostEstimate(flops=flops, transcendentals=0, bytes_accessed=bytes_accessed)

    kernel = _make_ensemble_mlp_kernel(n_hidden, jnp.bfloat16)
    pre = pl.pallas_call(
        kernel,
        out_shape=jax.ShapeDtypeStruct((batch, out_width), jnp.float32),
        grid=grid,
        in_specs=in_specs,
        out_specs=out_spec,
        compiler_params=pltpu.CompilerParams(
            dimension_semantics=("parallel",),   # v7x: shard batch tiles across both TCs
            vmem_limit_bytes=vmem_limit,
        ),
        cost_estimate=cost,
    )(*flat_inputs)

    output = pre.reshape(batch, num_samples, -1)
    if return_preactivations:
        return output, pre
    return output


def init_ensemble_mlp_params(key, input_size, hidden_sizes, output_size,
                             num_samples, init_w=0.003, b_init_value=0.1):
    """Deterministic synthetic init mirroring the PyTorch module's __init__ (f32)."""
    params = []
    in_size = input_size
    for next_size in hidden_sizes:
        out_size = next_size * num_samples
        key, wk = jax.random.split(key)
        # ptu.fanin_init: uniform(-1/sqrt(fan_in), 1/sqrt(fan_in))
        bound = 1.0 / jnp.sqrt(jnp.float32(in_size))
        w = jax.random.uniform(wk, (in_size, out_size), jnp.float32, -bound, bound)
        b = jnp.full((1, out_size), b_init_value, dtype=jnp.float32)
        params.append((w, b))
        in_size = out_size
    # last_fc: uniform(-init_w, init_w) for both weight and bias
    out_size = output_size * num_samples
    key, wk, bk = jax.random.split(key, 3)
    w_last = jax.random.uniform(wk, (in_size, out_size), jnp.float32, -init_w, init_w)
    b_last = jax.random.uniform(bk, (1, out_size), jnp.float32, -init_w, init_w)
    params.append((w_last, b_last))
    return params


def reference_forward_bf16(x, params, num_samples, weight_dtype=jnp.bfloat16):
    """Pure-JAX reference using the same bf16-input / f32-accumulate matmuls."""
    h = x.astype(weight_dtype)
    for w, b in params[:-1]:
        z = jnp.dot(h, w.astype(weight_dtype), preferred_element_type=jnp.float32)
        h = jnp.maximum(z + b, 0.0).astype(weight_dtype)
    w, b = params[-1]
    pre = jnp.dot(h, w.astype(weight_dtype), preferred_element_type=jnp.float32) + b
    return pre.reshape(x.shape[0], num_samples, -1)


def reference_forward_f32(x, params, num_samples):
    """Full-precision reference of the original module semantics."""
    h = x
    for w, b in params[:-1]:
        h = jnp.maximum(h @ w + b, 0.0)
    w, b = params[-1]
    return (h @ w + b).reshape(x.shape[0], num_samples, -1)


if __name__ == "__main__":
    # Small RL-style shapes: batch spans two batch tiles (128 + ragged 72), layer widths
    # 256-aligned (hidden 64 * num_samples 4 = 256) for full v6e/v7x MXU occupancy.
    batch = 200
    input_size = 32
    hidden_sizes = (64, 64)     # per-sample hidden widths
    output_size = 8
    num_samples = 4             # ensemble size -> hidden layer widths 256, output width 32

    key = jax.random.PRNGKey(0)
    key, xk = jax.random.split(key)
    x = jax.random.normal(xk, (batch, input_size), dtype=jnp.float32)

    params = init_ensemble_mlp_params(
        key, input_size, hidden_sizes, output_size, num_samples
    )
    # One-time weight prep (bf16 cast) hoisted out of the per-call forward path.
    prepped = prep_params(params)

    out = ensemble_mlp_forward(x, prepped, num_samples)
    out = jax.block_until_ready(out)

    assert out.shape == (batch, num_samples, output_size), out.shape

    ref_bf16 = reference_forward_bf16(x, params, num_samples)
    assert jnp.allclose(out, ref_bf16, atol=1e-3, rtol=1e-3), "mismatch vs bf16 reference"

    ref_f32 = reference_forward_f32(x, params, num_samples)
    assert jnp.allclose(out, ref_f32, atol=2e-2, rtol=2e-2), "mismatch vs f32 reference"

    print("KERNEL_OK")
</pallas_src>

<mosaic_0001>
module attributes {stable_mosaic.version = 11 : i64} {
  func.func @kernel(%arg0: i32, %arg1: memref<128x32xf32, #tpu.memory_space<vmem>>, %arg2: memref<32x256xbf16, #tpu.memory_space<vmem>>, %arg3: memref<1x256xf32, #tpu.memory_space<vmem>>, %arg4: memref<256x256xbf16, #tpu.memory_space<vmem>>, %arg5: memref<1x256xf32, #tpu.memory_space<vmem>>, %arg6: memref<256x32xbf16, #tpu.memory_space<vmem>>, %arg7: memref<1x32xf32, #tpu.memory_space<vmem>>, %arg8: memref<128x32xf32, #tpu.memory_space<vmem>>) attributes {dimension_semantics = [#tpu.dimension_semantics<parallel>], iteration_bounds = array<i64: 2>, scalar_prefetch = 0 : i64, scratch_operands = 0 : i64, tpu.core_type = #tpu.core_type<tc>, window_params = [{transform_indices = @transform_0, window_bounds = array<i64: 128, 32>}, {pipeline_mode = #tpu.pipeline_mode<synchronous>, transform_indices = @transform_1, window_bounds = array<i64: 32, 256>}, {pipeline_mode = #tpu.pipeline_mode<synchronous>, transform_indices = @transform_2, window_bounds = array<i64: 1, 256>}, {pipeline_mode = #tpu.pipeline_mode<synchronous>, transform_indices = @transform_3, window_bounds = array<i64: 256, 256>}, {pipeline_mode = #tpu.pipeline_mode<synchronous>, transform_indices = @transform_4, window_bounds = array<i64: 1, 256>}, {pipeline_mode = #tpu.pipeline_mode<synchronous>, transform_indices = @transform_5, window_bounds = array<i64: 256, 32>}, {pipeline_mode = #tpu.pipeline_mode<synchronous>, transform_indices = @transform_6, window_bounds = array<i64: 1, 32>}, {transform_indices = @transform_7, window_bounds = array<i64: 128, 32>}]} {
    %c0 = arith.constant 0 : index
    %c0_0 = arith.constant 0 : index
    %0 = vector.load %arg1[%c0, %c0_0] : memref<128x32xf32, #tpu.memory_space<vmem>>, vector<128x32xf32>
    %1 = arith.truncf %0 : vector<128x32xf32> to vector<128x32xbf16>
    %c0_1 = arith.constant 0 : index
    %c0_2 = arith.constant 0 : index
    %2 = vector.load %arg2[%c0_1, %c0_2] : memref<32x256xbf16, #tpu.memory_space<vmem>>, vector<32x256xbf16>
    %c0_3 = arith.constant 0 : index
    %c0_4 = arith.constant 0 : index
    %3 = vector.load %arg3[%c0_3, %c0_4] : memref<1x256xf32, #tpu.memory_space<vmem>>, vector<1x256xf32>
    %cst = arith.constant dense<0.000000e+00> : vector<128x256xf32>
    %4 = tpu.matmul %1, %2, %cst {dimension_numbers = #tpu.dot_dimension_numbers<[1], [0], [0], [1], [0, 0, 1, 1], [], []>} : vector<128x32xbf16>, vector<32x256xbf16>, vector<128x256xf32> -> vector<128x256xf32>
    %5 = vector.broadcast %3 : vector<1x256xf32> to vector<128x256xf32>
    %6 = arith.addf %4, %5 : vector<128x256xf32>
    %cst_5 = arith.constant 0.000000e+00 : f32
    %7 = vector.broadcast %cst_5 : f32 to vector<128x256xf32>
    %8 = arith.maximumf %6, %7 : vector<128x256xf32>
    %9 = arith.truncf %8 : vector<128x256xf32> to vector<128x256xbf16>
    %c0_6 = arith.constant 0 : index
    %c0_7 = arith.constant 0 : index
    %10 = vector.load %arg4[%c0_6, %c0_7] : memref<256x256xbf16, #tpu.memory_space<vmem>>, vector<256x256xbf16>
    %c0_8 = arith.constant 0 : index
    %c0_9 = arith.constant 0 : index
    %11 = vector.load %arg5[%c0_8, %c0_9] : memref<1x256xf32, #tpu.memory_space<vmem>>, vector<1x256xf32>
    %cst_10 = arith.constant dense<0.000000e+00> : vector<128x256xf32>
    %12 = tpu.matmul %9, %10, %cst_10 {dimension_numbers = #tpu.dot_dimension_numbers<[1], [0], [0], [1], [0, 0, 1, 1], [], []>} : vector<128x256xbf16>, vector<256x256xbf16>, vector<128x256xf32> -> vector<128x256xf32>
    %13 = vector.broadcast %11 : vector<1x256xf32> to vector<128x256xf32>
    %14 = arith.addf %12, %13 : vector<128x256xf32>
    %cst_11 = arith.constant 0.000000e+00 : f32
    %15 = vector.broadcast %cst_11 : f32 to vector<128x256xf32>
    %16 = arith.maximumf %14, %15 : vector<128x256xf32>
    %17 = arith.truncf %16 : vector<128x256xf32> to vector<128x256xbf16>
    %c0_12 = arith.constant 0 : index
    %c0_13 = arith.constant 0 : index
    %18 = vector.load %arg6[%c0_12, %c0_13] : memref<256x32xbf16, #tpu.memory_space<vmem>>, vector<256x32xbf16>
    %c0_14 = arith.constant 0 : index
    %c0_15 = arith.constant 0 : index
    %19 = vector.load %arg7[%c0_14, %c0_15] : memref<1x32xf32, #tpu.memory_space<vmem>>, vector<1x32xf32>
    %cst_16 = arith.constant dense<0.000000e+00> : vector<128x32xf32>
    %20 = tpu.matmul %17, %18, %cst_16 {dimension_numbers = #tpu.dot_dimension_numbers<[1], [0], [0], [1], [0, 0, 1, 1], [], []>} : vector<128x256xbf16>, vector<256x32xbf16>, vector<128x32xf32> -> vector<128x32xf32>
    %21 = vector.broadcast %19 : vector<1x32xf32> to vector<128x32xf32>
    %22 = arith.addf %20, %21 : vector<128x32xf32>
    %c0_17 = arith.constant 0 : index
    %c0_18 = arith.constant 0 : index
    %23 = vector.load %arg8[%c0_17, %c0_18] : memref<128x32xf32, #tpu.memory_space<vmem>>, vector<128x32xf32>
    tpu.vector_store %arg8[%c0_17, %c0_18], %22 {strides = array<i32>} : memref<128x32xf32, #tpu.memory_space<vmem>>, vector<128x32xf32>,
    return
  }
  func.func @transform_0(%arg0: i32) -> (i32, i32) {
    %c0_i32 = arith.constant 0 : i32
    %c0_i32_0 = arith.constant 0 : i32
    return %arg0, %c0_i32 : i32, i32
  }
  func.func @transform_1(%arg0: i32) -> (i32, i32) {
    %c0_i32 = arith.constant 0 : i32
    %c0_i32_0 = arith.constant 0 : i32
    %c0_i32_1 = arith.constant 0 : i32
    return %c0_i32, %c0_i32_0 : i32, i32
  }
  func.func @transform_2(%arg0: i32) -> (i32, i32) {
    %c0_i32 = arith.constant 0 : i32
    %c0_i32_0 = arith.constant 0 : i32
    %c0_i32_1 = arith.constant 0 : i32
    return %c0_i32, %c0_i32_0 : i32, i32
  }
  func.func @transform_3(%arg0: i32) -> (i32, i32) {
    %c0_i32 = arith.constant 0 : i32
    %c0_i32_0 = arith.constant 0 : i32
    %c0_i32_1 = arith.constant 0 : i32
    return %c0_i32, %c0_i32_0 : i32, i32
  }
  func.func @transform_4(%arg0: i32) -> (i32, i32) {
    %c0_i32 = arith.constant 0 : i32
    %c0_i32_0 = arith.constant 0 : i32
    %c0_i32_1 = arith.constant 0 : i32
    return %c0_i32, %c0_i32_0 : i32, i32
  }
  func.func @transform_5(%arg0: i32) -> (i32, i32) {
    %c0_i32 = arith.constant 0 : i32
    %c0_i32_0 = arith.constant 0 : i32
    %c0_i32_1 = arith.constant 0 : i32
    return %c0_i32, %c0_i32_0 : i32, i32
  }
  func.func @transform_6(%arg0: i32) -> (i32, i32) {
    %c0_i32 = arith.constant 0 : i32
    %c0_i32_0 = arith.constant 0 : i32
    %c0_i32_1 = arith.constant 0 : i32
    return %c0_i32, %c0_i32_0 : i32, i32
  }
  func.func @transform_7(%arg0: i32) -> (i32, i32) {
    %c0_i32 = arith.constant 0 : i32
    %c0_i32_0 = arith.constant 0 : i32
    return %arg0, %c0_i32 : i32, i32
  }
}

</mosaic_0001>

<llo_original>
// kernel: tpu_custom_call.1
$region0: #{tpu_custom_call.1}
  #allocation0 [shape = 'u32[]', space=smem, size = 0x4, offset = 0x4, fixed_abs, tag = 'smem constant byte address 0x4 - core index']
  #allocation1 [shape = 'u32[72,128]{1,0:T(1,128)}', space=vmem, size = 0x9000, scoped, tag = 'internal scratch']
  %s0 = inlined_call_operand.vmem [shape: f32[200,32], index: 0, kind: input, shape index: {}]
  %s1 = inlined_call_operand.vmem [shape: bf16[32,256], index: 1, kind: input, shape index: {}]
  %s2 = inlined_call_operand.vmem [shape: f32[1,256], index: 2, kind: input, shape index: {}]
  %s3 = inlined_call_operand.vmem [shape: bf16[256,256], index: 3, kind: input, shape index: {}]
  %s4 = inlined_call_operand.vmem [shape: f32[1,256], index: 4, kind: input, shape index: {}]
  %s5 = inlined_call_operand.vmem [shape: bf16[256,32], index: 5, kind: input, shape index: {}]
  %s6 = inlined_call_operand.vmem [shape: f32[1,32], index: 6, kind: input, shape index: {}]
  %s7 = inlined_call_operand.vmem [shape: f32[200,32], index: 7, kind: output, shape index: {}]
  %s8 = sld [smem:[#allocation0]]
  $region109: #{tpu_custom_call.1} parent=0
    _
  %s10 = ssub.s32 1, %s8
  %s11 = scalar_select 0, %s10, %s8
  $region1: #{tpu_custom_call.1} parent=0
    #allocation2 [shape = 'u8[131072]{0}', space=vmem, size = 0x20000, scoped, tag = 'output window, operand 0']
    loop: start=0, step=1, limit=4
    $region2: #{tpu_custom_call.1} parent=1 // loop_pre_header
      _
    $region3: #{tpu_custom_call.1} parent=1 // loop_header
      %s13 = sphi 0, %s17
      %p14 = scmp.ge.s32.totalorder %s13, 4
      %s23 = sphi 0, %s25
      %s26 = sphi 0, %s23
      %s27 = sphi 0, %s26
      %s43 = sphi 0, %s27
      %s47 = sphi 0, %s47
      %s49 = sphi 0, %s47
      %s50 = sphi 0, %s49
      %s64 = sphi 0, %s50
      %s68 = sphi 0, %s68
      %s70 = sphi 0, %s68
      %s71 = sphi 0, %s70
      %s85 = sphi 0, %s71
      %s89 = sphi 0, %s89
      %s91 = sphi 0, %s89
      %s92 = sphi 0, %s91
      %s106 = sphi 0, %s92
      %s110 = sphi 0, %s110
      %s112 = sphi 0, %s110
      %s113 = sphi 0, %s112
      %s127 = sphi 0, %s113
      %s131 = sphi 0, %s131
      %s133 = sphi 0, %s131
      %s134 = sphi 0, %s133
      %s148 = sphi 0, %s134
      %s152 = sphi 0, %s152
      %s154 = sphi 0, %s152
      %s155 = sphi 0, %s154
      %s169 = sphi 0, %s155
      %s175 = sphi 0, %s177
      %s178 = sphi 0, %s175
      %s179 = sphi 0, %s178
      %s195 = sphi 0, %s179
    $region4: #{tpu_custom_call.1} parent=1 // loop_header_branch
      %16 = sbr.rel (%p14) target = $region8
    $region5: #{tpu_custom_call.1} parent=1 // loop_body
      %s18 = ssub.s32 %s13, 1
      %s19 = ssub.s32 %s13, 2
      %s20 = sadd.s32 %s13, 1
      %s21 = ssub.s32 %s13, %s20
      %p22 = scmp.eq.s32.totalorder %s21, 0
      %s24 = sadd.s32 %s23, 1
      %s25 = scalar_select %p22, %s23, %s24
      %p28 = pneg %p22
      %p29 = scmp.eq.s32.totalorder %s13, 1
      %p30 = por %p28, %p29
      %p31 = scmp.ne.s32.totalorder %s23, %s26
      %p32 = scmp.eq.s32.totalorder %s13, 0
      %p33 = por %p31, %p32
      %p34 = scmp.ne.s32.totalorder %s23, %s26
      %p35 = scmp.eq.s32.totalorder %s18, 1
      %p36 = por %p34, %p35
      %p37 = scmp.ne.s32.totalorder %s26, %s27
      %p38 = scmp.eq.s32.totalorder %s18, 0
      %p39 = por %p37, %p38
      %p40 = scmp.ne.s32.totalorder %s26, %s27
      %p41 = scmp.eq.s32.totalorder %s19, 1
      %p42 = por %p40, %p41
      %p44 = scmp.ne.s32.totalorder %s27, %s43
      %p45 = scmp.eq.s32.totalorder %s19, 0
      %p46 = por %p44, %p45
      %s48 = sadd.s32 %s47, 1
      %p51 = scmp.eq.s32.totalorder %s13, 1
      %p52 = scmp.ne.s32.totalorder %s47, %s49
      %p53 = scmp.eq.s32.totalorder %s13, 0
      %p54 = por %p52, %p53
      %p55 = scmp.ne.s32.totalorder %s47, %s49
      %p56 = scmp.eq.s32.totalorder %s18, 1
      %p57 = por %p55, %p56
      %p58 = scmp.ne.s32.totalorder %s49, %s50
      %p59 = scmp.eq.s32.totalorder %s18, 0
      %p60 = por %p58, %p59
      %p61 = scmp.ne.s32.totalorder %s49, %s50
      %p62 = scmp.eq.s32.totalorder %s19, 1
      %p63 = por %p61, %p62
      %p65 = scmp.ne.s32.totalorder %s50, %s64
      %p66 = scmp.eq.s32.totalorder %s19, 0
      %p67 = por %p65, %p66
      %s69 = sadd.s32 %s68, 1
      %p72 = scmp.eq.s32.totalorder %s13, 1
      %p73 = scmp.ne.s32.totalorder %s68, %s70
      %p74 = scmp.eq.s32.totalorder %s13, 0
      %p75 = por %p73, %p74
      %p76 = scmp.ne.s32.totalorder %s68, %s70
      %p77 = scmp.eq.s32.totalorder %s18, 1
      %p78 = por %p76, %p77
      %p79 = scmp.ne.s32.totalorder %s70, %s71
      %p80 = scmp.eq.s32.totalorder %s18, 0
      %p81 = por %p79, %p80
      %p82 = scmp.ne.s32.totalorder %s70, %s71
      %p83 = scmp.eq.s32.totalorder %s19, 1
      %p84 = por %p82, %p83
      %p86 = scmp.ne.s32.totalorder %s71, %s85
      %p87 = scmp.eq.s32.totalorder %s19, 0
      %p88 = por %p86, %p87
      %s90 = sadd.s32 %s89, 1
      %p93 = scmp.eq.s32.totalorder %s13, 1
      %p94 = scmp.ne.s32.totalorder %s89, %s91
      %p95 = scmp.eq.s32.totalorder %s13, 0
      %p96 = por %p94, %p95
      %p97 = scmp.ne.s32.totalorder %s89, %s91
      %p98 = scmp.eq.s32.totalorder %s18, 1
      %p99 = por %p97, %p98
      %p100 = scmp.ne.s32.totalorder %s91, %s92
      %p101 = scmp.eq.s32.totalorder %s18, 0
      %p102 = por %p100, %p101
      %p103 = scmp.ne.s32.totalorder %s91, %s92
      %p104 = scmp.eq.s32.totalorder %s19, 1
      %p105 = por %p103, %p104
      %p107 = scmp.ne.s32.totalorder %s92, %s106
      %p108 = scmp.eq.s32.totalorder %s19, 0
      %p109 = por %p107, %p108
      %s111 = sadd.s32 %s110, 1
      %p114 = scmp.eq.s32.totalorder %s13, 1
      %p115 = scmp.ne.s32.totalorder %s110, %s112
      %p116 = scmp.eq.s32.totalorder %s13, 0
      %p117 = por %p115, %p116
      %p118 = scmp.ne.s32.totalorder %s110, %s112
      %p119 = scmp.eq.s32.totalorder %s18, 1
      %p120 = por %p118, %p119
      %p121 = scmp.ne.s32.totalorder %s112, %s113
      %p122 = scmp.eq.s32.totalorder %s18, 0
      %p123 = por %p121, %p122
      %p124 = scmp.ne.s32.totalorder %s112, %s113
      %p125 = scmp.eq.s32.totalorder %s19, 1
      %p126 = por %p124, %p125
      %p128 = scmp.ne.s32.totalorder %s113, %s127
      %p129 = scmp.eq.s32.totalorder %s19, 0
      %p130 = por %p128, %p129
      %s132 = sadd.s32 %s131, 1
      %p135 = scmp.eq.s32.totalorder %s13, 1
      %p136 = scmp.ne.s32.totalorder %s131, %s133
      %p137 = scmp.eq.s32.totalorder %s13, 0
      %p138 = por %p136, %p137
      %p139 = scmp.ne.s32.totalorder %s131, %s133
      %p140 = scmp.eq.s32.totalorder %s18, 1
      %p141 = por %p139, %p140
      %p142 = scmp.ne.s32.totalorder %s133, %s134
      %p143 = scmp.eq.s32.totalorder %s18, 0
      %p144 = por %p142, %p143
      %p145 = scmp.ne.s32.totalorder %s133, %s134
      %p146 = scmp.eq.s32.totalorder %s19, 1
      %p147 = por %p145, %p146
      %p149 = scmp.ne.s32.totalorder %s134, %s148
      %p150 = scmp.eq.s32.totalorder %s19, 0
      %p151 = por %p149, %p150
      %s153 = sadd.s32 %s152, 1
      %p156 = scmp.eq.s32.totalorder %s13, 1
      %p157 = scmp.ne.s32.totalorder %s152, %s154
      %p158 = scmp.eq.s32.totalorder %s13, 0
      %p159 = por %p157, %p158
      %p160 = scmp.ne.s32.totalorder %s152, %s154
      %p161 = scmp.eq.s32.totalorder %s18, 1
      %p162 = por %p160, %p161
      %p163 = scmp.ne.s32.totalorder %s154, %s155
      %p164 = scmp.eq.s32.totalorder %s18, 0
      %p165 = por %p163, %p164
      %p166 = scmp.ne.s32.totalorder %s154, %s155
      %p167 = scmp.eq.s32.totalorder %s19, 1
      %p168 = por %p166, %p167
      %p170 = scmp.ne.s32.totalorder %s155, %s169
      %p171 = scmp.eq.s32.totalorder %s19, 0
      %p172 = por %p170, %p171
      %s173 = ssub.s32 %s13, %s20
      %p174 = scmp.eq.s32.totalorder %s173, 0
      %s176 = sadd.s32 %s175, 1
      %s177 = scalar_select %p174, %s175, %s176
      %p180 = pneg %p174
      %p181 = scmp.eq.s32.totalorder %s13, 1
      %p182 = por %p180, %p181
      %p183 = scmp.ne.s32.totalorder %s175, %s178
      %p184 = scmp.eq.s32.totalorder %s13, 0
      %p185 = por %p183, %p184
      %p186 = scmp.ne.s32.totalorder %s175, %s178
      %p187 = scmp.eq.s32.totalorder %s18, 1
      %p188 = por %p186, %p187
      %p189 = scmp.ne.s32.totalorder %s178, %s179
      %p190 = scmp.eq.s32.totalorder %s18, 0
      %p191 = por %p189, %p190
      %p192 = scmp.ne.s32.totalorder %s178, %s179
      %p193 = scmp.eq.s32.totalorder %s19, 1
      %p194 = por %p192, %p193
      %p196 = scmp.ne.s32.totalorder %s179, %s195
      %p197 = scmp.eq.s32.totalorder %s19, 0
      %p198 = por %p196, %p197
      %p199 = scmp.le.s32.totalorder 1, %s13
      %p200 = scmp.lt.s32.totalorder %s13, 3
      %p201 = pnand %p199, %p200
      %p202 = pneg %p201
      // Predicated region
      $region9: #{tpu_custom_call.1} parent=5 // pred_check
        _
      $region10: #{tpu_custom_call.1} parent=5 // pred_check_branch
        %204 = sbr.rel (%p201) target = $region12
      $region11: #{tpu_custom_call.1} parent=5 // pred_region
        %s205 = ssub.s32 %s13, 1
        // Predicated region
        $region13: #{tpu_custom_call.1} parent=11 // pred_check
          %p206 = pneg %p60
        $region14: #{tpu_custom_call.1} parent=11 // pred_check_branch
          %208 = sbr.rel (%p206) target = $region16
        $region15: #{tpu_custom_call.1} parent=11 // pred_region
          _
        $region16: #{tpu_custom_call.1} parent=11 // pred_fallthru
          _
        // Predicated region
        $region17: #{tpu_custom_call.1} parent=11 // pred_check
          %p209 = pneg %p81
        $region18: #{tpu_custom_call.1} parent=11 // pred_check_branch
          %211 = sbr.rel (%p209) target = $region20
        $region19: #{tpu_custom_call.1} parent=11 // pred_region
          _
        $region20: #{tpu_custom_call.1} parent=11 // pred_fallthru
          _
        // Predicated region
        $region21: #{tpu_custom_call.1} parent=11 // pred_check
          %p212 = pneg %p102
        $region22: #{tpu_custom_call.1} parent=11 // pred_check_branch
          %214 = sbr.rel (%p212) target = $region24
        $region23: #{tpu_custom_call.1} parent=11 // pred_region
          _
        $region24: #{tpu_custom_call.1} parent=11 // pred_fallthru
          _
        // Predicated region
        $region25: #{tpu_custom_call.1} parent=11 // pred_check
          %p215 = pneg %p123
        $region26: #{tpu_custom_call.1} parent=11 // pred_check_branch
          %217 = sbr.rel (%p215) target = $region28
        $region27: #{tpu_custom_call.1} parent=11 // pred_region
          _
        $region28: #{tpu_custom_call.1} parent=11 // pred_fallthru
          _
        // Predicated region
        $region29: #{tpu_custom_call.1} parent=11 // pred_check
          %p218 = pneg %p144
        $region30: #{tpu_custom_call.1} parent=11 // pred_check_branch
          %220 = sbr.rel (%p218) target = $region32
        $region31: #{tpu_custom_call.1} parent=11 // pred_region
          _
        $region32: #{tpu_custom_call.1} parent=11 // pred_fallthru
          _
        // Predicated region
        $region33: #{tpu_custom_call.1} parent=11 // pred_check
          %p221 = pneg %p165
        $region34: #{tpu_custom_call.1} parent=11 // pred_check_branch
          %223 = sbr.rel (%p221) target = $region36
        $region35: #{tpu_custom_call.1} parent=11 // pred_region
          _
        $region36: #{tpu_custom_call.1} parent=11 // pred_fallthru
          _
      $region12: #{tpu_custom_call.1} parent=5 // pred_fallthru
        _
      %p224 = scmp.lt.s32.totalorder %s13, 2
      // Predicated region
      $region37: #{tpu_custom_call.1} parent=5 // pred_check
        %p225 = pneg %p224
      $region38: #{tpu_custom_call.1} parent=5 // pred_check_branch
        %227 = sbr.rel (%p225) target = $region40
      $region39: #{tpu_custom_call.1} parent=5 // pred_region
        // Predicated region
        $region41: #{tpu_custom_call.1} parent=39 // pred_check
          %p228 = pneg %p33
        $region42: #{tpu_custom_call.1} parent=39 // pred_check_branch
          %230 = sbr.rel (%p228) target = $region44
        $region43: #{tpu_custom_call.1} parent=39 // pred_region
          %s231 = smul.u32 16, %s13
          %s232 = ssub.s32 25, %s231
          %p233 = scmp.lt.s32.totalorder %s232, 16
          %s234 = scalar_select %p233, %s232, 16
          %s235 = smul.u32 8, %s234
          %p236 = scmp.lt.s32.totalorder %s231, 24
          %s237 = scalar_select %p236, %s231, 24
          %s238 = smul.addr %s237, 8
          %s239 = scalar_lea.vmem %s0, %s238
          %s240 = smul.u32 16, %s13
          %s241 = ssub.s32 25, %s240
          %p242 = scmp.lt.s32.totalorder %s241, 16
          %s243 = scalar_select %p242, %s241, 16
          %s244 = smul.u32 8, %s243
        $region44: #{tpu_custom_call.1} parent=39 // pred_fallthru
          _
      $region40: #{tpu_custom_call.1} parent=5 // pred_fallthru
        _
      %p245 = scmp.le.s32.totalorder 1, %s13
      %p246 = scmp.lt.s32.totalorder %s13, 3
      %p247 = pnand %p245, %p246
      %p248 = pneg %p247
      // Predicated region
      $region45: #{tpu_custom_call.1} parent=5 // pred_check
        _
      $region46: #{tpu_custom_call.1} parent=5 // pred_check_branch
        %250 = sbr.rel (%p247) target = $region48
      $region47: #{tpu_custom_call.1} parent=5 // pred_region
        %s251 = ssub.s32 %s13, 1
        %s252 = smul.u32 16, %s18
        %s253 = ssub.s32 25, %s252
        %p254 = scmp.lt.s32.totalorder %s253, 16
        %s255 = scalar_select %p254, %s253, 16
        %s256 = smul.u32 8, %s255
        %p257 = scmp.lt.s32.totalorder %s252, 24
        %s258 = scalar_select %p257, %s252, 24
        %s259 = smul.addr %s258, 8
        %s260 = scalar_lea.vmem %s0, %s259
        %p261 = pneg %p39
        %p262 = pneg %p36
        %p263 = pneg %p60
        %p264 = pneg %p57
        %p265 = pneg %p81
        %p266 = pneg %p78
        %p267 = pneg %p102
        %p268 = pneg %p99
        %p269 = pneg %p123
        %p270 = pneg %p120
        %p271 = pneg %p144
        %p272 = pneg %p141
        %p273 = pneg %p165
        %p274 = pneg %p162
        %p275 = pneg %p191
        %p276 = pneg %p188
        %s277 = sand.u32 %s178, 1
        %s278 = sand.u32 %s178, 1
        %s279 = smul.addr %s278, 128
        %s280 = scalar_lea.vmem [#allocation2], %s279
        %s281 = smul.u32 16, %s18
        %s282 = ssub.s32 25, %s281
        %p283 = scmp.lt.s32.totalorder %s282, 16
        %s284 = scalar_select %p283, %s282, 16
        %s285 = smul.u32 8, %s284
        %p286 = scmp.lt.s32.totalorder %s281, 24
        %s287 = scalar_select %p286, %s281, 24
        %s288 = smul.addr %s287, 8
        %s289 = scalar_lea.vmem %s0, %s288
        %s290 = smul.u32 16, %s18
        %s291 = ssub.s32 25, %s290
        %p292 = scmp.lt.s32.totalorder %s291, 16
        %s293 = scalar_select %p292, %s291, 16
        %s294 = smul.u32 8, %s293
        %s295 = smul.u32 16, %s18
        %s296 = ssub.s32 25, %s295
        %p297 = scmp.lt.s32.totalorder %s296, 16
        %s298 = scalar_select %p297, %s296, 16
        %s299 = smul.u32 8, %s298
        %v301 = vld [vmem:[%s289] sm:$0xff]
        %v302 = vld [vmem:[%s289 + $0x8] sm:$0xff]
        %v303 = vld [vmem:[%s289 + $0x10] sm:$0xff]
        %v304 = vld [vmem:[%s289 + $0x18] sm:$0xff]
        %v305 = vld [vmem:[%s289 + $0x20] sm:$0xff]
        %v306 = vld [vmem:[%s289 + $0x28] sm:$0xff]
        %v307 = vld [vmem:[%s289 + $0x30] sm:$0xff]
        %v308 = vld [vmem:[%s289 + $0x38] sm:$0xff]
        %v309 = vld [vmem:[%s289 + $0x40] sm:$0xff]
        %v310 = vld [vmem:[%s289 + $0x48] sm:$0xff]
        %v311 = vld [vmem:[%s289 + $0x50] sm:$0xff]
        %v312 = vld [vmem:[%s289 + $0x58] sm:$0xff]
        %v313 = vld [vmem:[%s289 + $0x60] sm:$0xff]
        %v314 = vld [vmem:[%s289 + $0x68] sm:$0xff]
        %v315 = vld [vmem:[%s289 + $0x70] sm:$0xff]
        %v316 = vld [vmem:[%s289 + $0x78] sm:$0xff]
        %v317 = vpack.c.bf16 %v302, %v301
        %v318 = vpack.c.bf16 %v304, %v303
        %v319 = vpack.c.bf16 %v306, %v305
        %v320 = vpack.c.bf16 %v308, %v307
        %v321 = vpack.c.bf16 %v310, %v309
        %v322 = vpack.c.bf16 %v312, %v311
        %v323 = vpack.c.bf16 %v314, %v313
        %v324 = vpack.c.bf16 %v316, %v315
        %v325 = vld [vmem:[%s1] sm:$0xff]
        %v326 = vld [vmem:[%s1 + $0x8] sm:$0xff]
        %v327 = vld [vmem:[%s1 + $0x10] sm:$0xff]
        %v328 = vld [vmem:[%s1 + $0x18] sm:$0xff]
        %v329 = vld [vmem:[%s2] sm:$0x3]
        %v331 = vperm.slane %v329, 0
        %v332 = vperm.slane %v329, 1
        %v339 = vunpack.c.l.b16 %v325
        %v340 = vunpack.c.h.b16 %v325
        %v341 = vunpack.c.l.b16 %v326
        %v342 = vunpack.c.h.b16 %v326
        %v343 = vunpack.c.l.b16 %v327
        %v344 = vunpack.c.h.b16 %v327
        %v345 = vunpack.c.l.b16 %v328
        %v346 = vunpack.c.h.b16 %v328
        %v347 = vpack.c.b16 %v341, %v339
        %v348 = vpack.c.b16 %v342, %v340
        %v349 = vpack.c.b16 %v345, %v343
        %v350 = vpack.c.b16 %v346, %v344
        %vm355 = vcmask 261120
        %v357 = vsel %vm355, %v317, 0
        %v360 = vsel %vm355, %v318, 0
        %v363 = vsel %vm355, %v319, 0
        %v366 = vsel %vm355, %v320, 0
        %v369 = vsel %vm355, %v321, 0
        %v372 = vsel %vm355, %v322, 0
        %v375 = vsel %vm355, %v323, 0
        %v378 = vsel %vm355, %v324, 0
        %380 = vmatpush.bf16.msra.mxu0 0
        %381 = vmatpush.bf16.msra.mxu0 0
        %382 = vmatpush.bf16.msra.mxu0 0
        %383 = vmatpush.bf16.msra.mxu0 0
        %384 = vmatpush.bf16.msra.mxu0 0
        %385 = vmatpush.bf16.msra.mxu0 0
        %386 = vmatpush.bf16.msra.mxu0 %v349
        %387 = vmatpush.bf16.msra.mxu0 %v347
        %388 = vmatmul.bf16.gmra.mxu0 %v357
        %v389 = vpop.f32.mrf.mxu0
        %v390 = vadd.f32 %v331, %v389
        %v391 = vpop.f32.mrf.mxu0
        %v392 = vadd.f32 %v331, %v391
        %393 = vmatmul.bf16.gmra.mxu0 %v360
        %v394 = vpop.f32.mrf.mxu0
        %v395 = vadd.f32 %v331, %v394
        %v396 = vpop.f32.mrf.mxu0
        %v397 = vadd.f32 %v331, %v396
        %398 = vmatmul.bf16.gmra.mxu0 %v363
        %v399 = vpop.f32.mrf.mxu0
        %v400 = vadd.f32 %v331, %v399
        %v401 = vpop.f32.mrf.mxu0
        %v402 = vadd.f32 %v331, %v401
        %403 = vmatmul.bf16.gmra.mxu0 %v366
        %v404 = vpop.f32.mrf.mxu0
        %v405 = vadd.f32 %v331, %v404
        %v406 = vpop.f32.mrf.mxu0
        %v407 = vadd.f32 %v331, %v406
        %408 = vmatmul.bf16.gmra.mxu0 %v369
        %v409 = vpop.f32.mrf.mxu0
        %v410 = vadd.f32 %v331, %v409
        %v411 = vpop.f32.mrf.mxu0
        %v412 = vadd.f32 %v331, %v411
        %413 = vmatmul.bf16.gmra.mxu0 %v372
        %v414 = vpop.f32.mrf.mxu0
        %v415 = vadd.f32 %v331, %v414
        %v416 = vpop.f32.mrf.mxu0
        %v417 = vadd.f32 %v331, %v416
        %418 = vmatmul.bf16.gmra.mxu0 %v375
        %v419 = vpop.f32.mrf.mxu0
        %v420 = vadd.f32 %v331, %v419
        %v421 = vpop.f32.mrf.mxu0
        %v422 = vadd.f32 %v331, %v421
        %423 = vmatmul.bf16.gmra.mxu0 %v378
        %v424 = vpop.f32.mrf.mxu0
        %v425 = vadd.f32 %v331, %v424
        %v426 = vpop.f32.mrf.mxu0
        %v427 = vadd.f32 %v331, %v426
        %428 = vdwg.mxu0
        %429 = vmatpush.bf16.msra.mxu0 0
        %430 = vmatpush.bf16.msra.mxu0 0
        %431 = vmatpush.bf16.msra.mxu0 0
        %432 = vmatpush.bf16.msra.mxu0 0
        %433 = vmatpush.bf16.msra.mxu0 0
        %434 = vmatpush.bf16.msra.mxu0 0
        %435 = vmatpush.bf16.msra.mxu0 %v350
        %436 = vmatpush.bf16.msra.mxu0 %v348
        %437 = vmatmul.bf16.gmra.mxu0 %v357
        %v438 = vpop.f32.mrf.mxu0
        %v439 = vadd.f32 %v332, %v438
        %v440 = vpop.f32.mrf.mxu0
        %v441 = vadd.f32 %v332, %v440
        %442 = vmatmul.bf16.gmra.mxu0 %v360
        %v443 = vpop.f32.mrf.mxu0
        %v444 = vadd.f32 %v332, %v443
        %v445 = vpop.f32.mrf.mxu0
        %v446 = vadd.f32 %v332, %v445
        %447 = vmatmul.bf16.gmra.mxu0 %v363
        %v448 = vpop.f32.mrf.mxu0
        %v449 = vadd.f32 %v332, %v448
        %v450 = vpop.f32.mrf.mxu0
        %v451 = vadd.f32 %v332, %v450
        %452 = vmatmul.bf16.gmra.mxu0 %v366
        %v453 = vpop.f32.mrf.mxu0
        %v454 = vadd.f32 %v332, %v453
        %v455 = vpop.f32.mrf.mxu0
        %v456 = vadd.f32 %v332, %v455
        %457 = vmatmul.bf16.gmra.mxu0 %v369
        %v458 = vpop.f32.mrf.mxu0
        %v459 = vadd.f32 %v332, %v458
        %v460 = vpop.f32.mrf.mxu0
        %v461 = vadd.f32 %v332, %v460
        %462 = vmatmul.bf16.gmra.mxu0 %v372
        %v463 = vpop.f32.mrf.mxu0
        %v464 = vadd.f32 %v332, %v463
        %v465 = vpop.f32.mrf.mxu0
        %v466 = vadd.f32 %v332, %v465
        %467 = vmatmul.bf16.gmra.mxu0 %v375
        %v468 = vpop.f32.mrf.mxu0
        %v469 = vadd.f32 %v332, %v468
        %v470 = vpop.f32.mrf.mxu0
        %v471 = vadd.f32 %v332, %v470
        %472 = vmatmul.bf16.gmra.mxu0 %v378
        %v473 = vpop.f32.mrf.mxu0
        %v474 = vadd.f32 %v332, %v473
        %v475 = vpop.f32.mrf.mxu0
        %v476 = vadd.f32 %v332, %v475
        %477 = vdwg.mxu0
        %v478 = vmax.f32 %v390, 0.0
        %v479 = vmax.f32 %v439, 0.0
        %v480 = vmax.f32 %v392, 0.0
        %v481 = vmax.f32 %v441, 0.0
        %v482 = vmax.f32 %v395, 0.0
        %v483 = vmax.f32 %v444, 0.0
        %v484 = vmax.f32 %v397, 0.0
        %v485 = vmax.f32 %v446, 0.0
        %v486 = vmax.f32 %v400, 0.0
        %v487 = vmax.f32 %v449, 0.0
        %v488 = vmax.f32 %v402, 0.0
        %v489 = vmax.f32 %v451, 0.0
        %v490 = vmax.f32 %v405, 0.0
        %v491 = vmax.f32 %v454, 0.0
        %v492 = vmax.f32 %v407, 0.0
        %v493 = vmax.f32 %v456, 0.0
        %v494 = vmax.f32 %v410, 0.0
        %v495 = vmax.f32 %v459, 0.0
        %v496 = vmax.f32 %v412, 0.0
        %v497 = vmax.f32 %v461, 0.0
        %v498 = vmax.f32 %v415, 0.0
        %v499 = vmax.f32 %v464, 0.0
        %v500 = vmax.f32 %v417, 0.0
        %v501 = vmax.f32 %v466, 0.0
        %v502 = vmax.f32 %v420, 0.0
        %v503 = vmax.f32 %v469, 0.0
        %v504 = vmax.f32 %v422, 0.0
        %v505 = vmax.f32 %v471, 0.0
        %v506 = vmax.f32 %v425, 0.0
        %v507 = vmax.f32 %v474, 0.0
        %v508 = vmax.f32 %v427, 0.0
        %v509 = vmax.f32 %v476, 0.0
        %v510 = vpack.c.bf16 %v480, %v478
        %v511 = vpack.c.bf16 %v481, %v479
        %v512 = vpack.c.bf16 %v484, %v482
        %v513 = vpack.c.bf16 %v485, %v483
        %v514 = vpack.c.bf16 %v488, %v486
        %v515 = vpack.c.bf16 %v489, %v487
        %v516 = vpack.c.bf16 %v492, %v490
        %v517 = vpack.c.bf16 %v493, %v491
        %v518 = vpack.c.bf16 %v496, %v494
        %v519 = vpack.c.bf16 %v497, %v495
        %v520 = vpack.c.bf16 %v500, %v498
        %v521 = vpack.c.bf16 %v501, %v499
        %v522 = vpack.c.bf16 %v504, %v502
        %v523 = vpack.c.bf16 %v505, %v503
        %v524 = vpack.c.bf16 %v508, %v506
        %v525 = vpack.c.bf16 %v509, %v507
        %v526 = vld [vmem:[%s3] sm:$0xff]
        %v527 = vld [vmem:[%s3 + $0x8] sm:$0xff]
        %v528 = vld [vmem:[%s3 + $0x10] sm:$0xff]
        %v529 = vld [vmem:[%s3 + $0x18] sm:$0xff]
        %v530 = vld [vmem:[%s3 + $0x20] sm:$0xff]
        %v531 = vld [vmem:[%s3 + $0x28] sm:$0xff]
        %v532 = vld [vmem:[%s3 + $0x30] sm:$0xff]
        %v533 = vld [vmem:[%s3 + $0x38] sm:$0xff]
        %v534 = vld [vmem:[%s3 + $0x40] sm:$0xff]
        %v535 = vld [vmem:[%s3 + $0x48] sm:$0xff]
        %v536 = vld [vmem:[%s3 + $0x50] sm:$0xff]
        %v537 = vld [vmem:[%s3 + $0x58] sm:$0xff]
        %v538 = vld [vmem:[%s3 + $0x60] sm:$0xff]
        %v539 = vld [vmem:[%s3 + $0x68] sm:$0xff]
        %v540 = vld [vmem:[%s3 + $0x70] sm:$0xff]
        %v541 = vld [vmem:[%s3 + $0x78] sm:$0xff]
        %v542 = vld [vmem:[%s3 + $0x80] sm:$0xff]
        %v543 = vld [vmem:[%s3 + $0x88] sm:$0xff]
        %v544 = vld [vmem:[%s3 + $0x90] sm:$0xff]
        %v545 = vld [vmem:[%s3 + $0x98] sm:$0xff]
        %v546 = vld [vmem:[%s3 + $0xa0] sm:$0xff]
        %v547 = vld [vmem:[%s3 + $0xa8] sm:$0xff]
        %v548 = vld [vmem:[%s3 + $0xb0] sm:$0xff]
        %v549 = vld [vmem:[%s3 + $0xb8] sm:$0xff]
        %v550 = vld [vmem:[%s3 + $0xc0] sm:$0xff]
        %v551 = vld [vmem:[%s3 + $0xc8] sm:$0xff]
        %v552 = vld [vmem:[%s3 + $0xd0] sm:$0xff]
        %v553 = vld [vmem:[%s3 + $0xd8] sm:$0xff]
        %v554 = vld [vmem:[%s3 + $0xe0] sm:$0xff]
        %v555 = vld [vmem:[%s3 + $0xe8] sm:$0xff]
        %v556 = vld [vmem:[%s3 + $0xf0] sm:$0xff]
        %v557 = vld [vmem:[%s3 + $0xf8] sm:$0xff]
        %v558 = vld [vmem:[%s4] sm:$0x3]
        %v560 = vperm.slane %v558, 0
        %v561 = vperm.slane %v558, 1
        %v596 = vunpack.c.l.b16 %v526
        %v597 = vunpack.c.h.b16 %v526
        %v598 = vunpack.c.l.b16 %v527
        %v599 = vunpack.c.h.b16 %v527
        %v600 = vunpack.c.l.b16 %v528
        %v601 = vunpack.c.h.b16 %v528
        %v602 = vunpack.c.l.b16 %v529
        %v603 = vunpack.c.h.b16 %v529
        %v604 = vunpack.c.l.b16 %v530
        %v605 = vunpack.c.h.b16 %v530
        %v606 = vunpack.c.l.b16 %v531
        %v607 = vunpack.c.h.b16 %v531
        %v608 = vunpack.c.l.b16 %v532
        %v609 = vunpack.c.h.b16 %v532
        %v610 = vunpack.c.l.b16 %v533
        %v611 = vunpack.c.h.b16 %v533
        %v612 = vunpack.c.l.b16 %v534
        %v613 = vunpack.c.h.b16 %v534
        %v614 = vunpack.c.l.b16 %v535
        %v615 = vunpack.c.h.b16 %v535
        %v616 = vunpack.c.l.b16 %v536
        %v617 = vunpack.c.h.b16 %v536
        %v618 = vunpack.c.l.b16 %v537
        %v619 = vunpack.c.h.b16 %v537
        %v620 = vunpack.c.l.b16 %v538
        %v621 = vunpack.c.h.b16 %v538
        %v622 = vunpack.c.l.b16 %v539
        %v623 = vunpack.c.h.b16 %v539
        %v624 = vunpack.c.l.b16 %v540
        %v625 = vunpack.c.h.b16 %v540
        %v626 = vunpack.c.l.b16 %v541
        %v627 = vunpack.c.h.b16 %v541
        %v628 = vunpack.c.l.b16 %v542
        %v629 = vunpack.c.h.b16 %v542
        %v630 = vunpack.c.l.b16 %v543
        %v631 = vunpack.c.h.b16 %v543
        %v632 = vunpack.c.l.b16 %v544
        %v633 = vunpack.c.h.b16 %v544
        %v634 = vunpack.c.l.b16 %v545
        %v635 = vunpack.c.h.b16 %v545
        %v636 = vunpack.c.l.b16 %v546
        %v637 = vunpack.c.h.b16 %v546
        %v638 = vunpack.c.l.b16 %v547
        %v639 = vunpack.c.h.b16 %v547
        %v640 = vunpack.c.l.b16 %v548
        %v641 = vunpack.c.h.b16 %v548
        %v642 = vunpack.c.l.b16 %v549
        %v643 = vunpack.c.h.b16 %v549
        %v644 = vunpack.c.l.b16 %v550
        %v645 = vunpack.c.h.b16 %v550
        %v646 = vunpack.c.l.b16 %v551
        %v647 = vunpack.c.h.b16 %v551
        %v648 = vunpack.c.l.b16 %v552
        %v649 = vunpack.c.h.b16 %v552
        %v650 = vunpack.c.l.b16 %v553
        %v651 = vunpack.c.h.b16 %v553
        %v652 = vunpack.c.l.b16 %v554
        %v653 = vunpack.c.h.b16 %v554
        %v654 = vunpack.c.l.b16 %v555
        %v655 = vunpack.c.h.b16 %v555
        %v656 = vunpack.c.l.b16 %v556
        %v657 = vunpack.c.h.b16 %v556
        %v658 = vunpack.c.l.b16 %v557
        %v659 = vunpack.c.h.b16 %v557
        %v660 = vpack.c.b16 %v598, %v596
        %v661 = vpack.c.b16 %v599, %v597
        %v662 = vpack.c.b16 %v602, %v600
        %v663 = vpack.c.b16 %v603, %v601
        %v664 = vpack.c.b16 %v606, %v604
        %v665 = vpack.c.b16 %v607, %v605
        %v666 = vpack.c.b16 %v610, %v608
        %v667 = vpack.c.b16 %v611, %v609
        %v668 = vpack.c.b16 %v614, %v612
        %v669 = vpack.c.b16 %v615, %v613
        %v670 = vpack.c.b16 %v618, %v616
        %v671 = vpack.c.b16 %v619, %v617
        %v672 = vpack.c.b16 %v622, %v620
        %v673 = vpack.c.b16 %v623, %v621
        %v674 = vpack.c.b16 %v626, %v624
        %v675 = vpack.c.b16 %v627, %v625
        %v676 = vpack.c.b16 %v630, %v628
        %v677 = vpack.c.b16 %v631, %v629
        %v678 = vpack.c.b16 %v634, %v632
        %v679 = vpack.c.b16 %v635, %v633
        %v680 = vpack.c.b16 %v638, %v636
        %v681 = vpack.c.b16 %v639, %v637
        %v682 = vpack.c.b16 %v642, %v640
        %v683 = vpack.c.b16 %v643, %v641
        %v684 = vpack.c.b16 %v646, %v644
        %v685 = vpack.c.b16 %v647, %v645
        %v686 = vpack.c.b16 %v650, %v648
        %v687 = vpack.c.b16 %v651, %v649
        %v688 = vpack.c.b16 %v654, %v652
        %v689 = vpack.c.b16 %v655, %v653
        %v690 = vpack.c.b16 %v658, %v656
        %v691 = vpack.c.b16 %v659, %v657
        %724 = vmatpush.bf16.msra.mxu0 %v674
        %725 = vmatpush.bf16.msra.mxu0 %v672
        %726 = vmatpush.bf16.msra.mxu0 %v670
        %727 = vmatpush.bf16.msra.mxu0 %v668
        %728 = vmatpush.bf16.msra.mxu0 %v666
        %729 = vmatpush.bf16.msra.mxu0 %v664
        %730 = vmatpush.bf16.msra.mxu0 %v662
        %731 = vmatpush.bf16.msra.mxu0 %v660
        %732 = vmatmul.bf16.gmra.mxu0 %v510
        %v733 = vpop.f32.mrf.mxu0
        %v734 = vadd.f32 %v560, %v733
        %v735 = vpop.f32.mrf.mxu0
        %v736 = vadd.f32 %v560, %v735
        %737 = vmatmul.bf16.gmra.mxu0 %v512
        %v738 = vpop.f32.mrf.mxu0
        %v739 = vadd.f32 %v560, %v738
        %v740 = vpop.f32.mrf.mxu0
        %v741 = vadd.f32 %v560, %v740
        %742 = vmatmul.bf16.gmra.mxu0 %v514
        %v743 = vpop.f32.mrf.mxu0
        %v744 = vadd.f32 %v560, %v743
        %v745 = vpop.f32.mrf.mxu0
        %v746 = vadd.f32 %v560, %v745
        %747 = vmatmul.bf16.gmra.mxu0 %v516
        %v748 = vpop.f32.mrf.mxu0
        %v749 = vadd.f32 %v560, %v748
        %v750 = vpop.f32.mrf.mxu0
        %v751 = vadd.f32 %v560, %v750
        %752 = vmatmul.bf16.gmra.mxu0 %v518
        %v753 = vpop.f32.mrf.mxu0
        %v754 = vadd.f32 %v560, %v753
        %v755 = vpop.f32.mrf.mxu0
        %v756 = vadd.f32 %v560, %v755
        %757 = vmatmul.bf16.gmra.mxu0 %v520
        %v758 = vpop.f32.mrf.mxu0
        %v759 = vadd.f32 %v560, %v758
        %v760 = vpop.f32.mrf.mxu0
        %v761 = vadd.f32 %v560, %v760
        %762 = vmatmul.bf16.gmra.mxu0 %v522
        %v763 = vpop.f32.mrf.mxu0
        %v764 = vadd.f32 %v560, %v763
        %v765 = vpop.f32.mrf.mxu0
        %v766 = vadd.f32 %v560, %v765
        %767 = vmatmul.bf16.gmra.mxu0 %v524
        %v768 = vpop.f32.mrf.mxu0
        %v769 = vadd.f32 %v560, %v768
        %v770 = vpop.f32.mrf.mxu0
        %v771 = vadd.f32 %v560, %v770
        %772 = vdwg.mxu0
        %773 = vmatpush.bf16.msra.mxu0 %v690
        %774 = vmatpush.bf16.msra.mxu0 %v688
        %775 = vmatpush.bf16.msra.mxu0 %v686
        %776 = vmatpush.bf16.msra.mxu0 %v684
        %777 = vmatpush.bf16.msra.mxu0 %v682
        %778 = vmatpush.bf16.msra.mxu0 %v680
        %779 = vmatpush.bf16.msra.mxu0 %v678
        %780 = vmatpush.bf16.msra.mxu0 %v676
        %781 = vmatmul.bf16.gmra.mxu0 %v511
        %v782 = vpop.f32.mrf.mxu0
        %v783 = vadd.f32 %v734, %v782
        %v784 = vpop.f32.mrf.mxu0
        %v785 = vadd.f32 %v736, %v784
        %786 = vmatmul.bf16.gmra.mxu0 %v513
        %v787 = vpop.f32.mrf.mxu0
        %v788 = vadd.f32 %v739, %v787
        %v789 = vpop.f32.mrf.mxu0
        %v790 = vadd.f32 %v741, %v789
        %791 = vmatmul.bf16.gmra.mxu0 %v515
        %v792 = vpop.f32.mrf.mxu0
        %v793 = vadd.f32 %v744, %v792
        %v794 = vpop.f32.mrf.mxu0
        %v795 = vadd.f32 %v746, %v794
        %796 = vmatmul.bf16.gmra.mxu0 %v517
        %v797 = vpop.f32.mrf.mxu0
        %v798 = vadd.f32 %v749, %v797
        %v799 = vpop.f32.mrf.mxu0
        %v800 = vadd.f32 %v751, %v799
        %801 = vmatmul.bf16.gmra.mxu0 %v519
        %v802 = vpop.f32.mrf.mxu0
        %v803 = vadd.f32 %v754, %v802
        %v804 = vpop.f32.mrf.mxu0
        %v805 = vadd.f32 %v756, %v804
        %806 = vmatmul.bf16.gmra.mxu0 %v521
        %v807 = vpop.f32.mrf.mxu0
        %v808 = vadd.f32 %v759, %v807
        %v809 = vpop.f32.mrf.mxu0
        %v810 = vadd.f32 %v761, %v809
        %811 = vmatmul.bf16.gmra.mxu0 %v523
        %v812 = vpop.f32.mrf.mxu0
        %v813 = vadd.f32 %v764, %v812
        %v814 = vpop.f32.mrf.mxu0
        %v815 = vadd.f32 %v766, %v814
        %816 = vmatmul.bf16.gmra.mxu0 %v525
        %v817 = vpop.f32.mrf.mxu0
        %v818 = vadd.f32 %v769, %v817
        %v819 = vpop.f32.mrf.mxu0
        %v820 = vadd.f32 %v771, %v819
        %821 = vdwg.mxu0
        %822 = vmatpush.bf16.msra.mxu0 %v675
        %823 = vmatpush.bf16.msra.mxu0 %v673
        %824 = vmatpush.bf16.msra.mxu0 %v671
        %825 = vmatpush.bf16.msra.mxu0 %v669
        %826 = vmatpush.bf16.msra.mxu0 %v667
        %827 = vmatpush.bf16.msra.mxu0 %v665
        %828 = vmatpush.bf16.msra.mxu0 %v663
        %829 = vmatpush.bf16.msra.mxu0 %v661
        %830 = vmatmul.bf16.gmra.mxu0 %v510
        %v831 = vpop.f32.mrf.mxu0
        %v832 = vadd.f32 %v561, %v831
        %v833 = vpop.f32.mrf.mxu0
        %v834 = vadd.f32 %v561, %v833
        %835 = vmatmul.bf16.gmra.mxu0 %v512
        %v836 = vpop.f32.mrf.mxu0
        %v837 = vadd.f32 %v561, %v836
        %v838 = vpop.f32.mrf.mxu0
        %v839 = vadd.f32 %v561, %v838
        %840 = vmatmul.bf16.gmra.mxu0 %v514
        %v841 = vpop.f32.mrf.mxu0
        %v842 = vadd.f32 %v561, %v841
        %v843 = vpop.f32.mrf.mxu0
        %v844 = vadd.f32 %v561, %v843
        %845 = vmatmul.bf16.gmra.mxu0 %v516
        %v846 = vpop.f32.mrf.mxu0
        %v847 = vadd.f32 %v561, %v846
        %v848 = vpop.f32.mrf.mxu0
        %v849 = vadd.f32 %v561, %v848
        %850 = vmatmul.bf16.gmra.mxu0 %v518
        %v851 = vpop.f32.mrf.mxu0
        %v852 = vadd.f32 %v561, %v851
        %v853 = vpop.f32.mrf.mxu0
        %v854 = vadd.f32 %v561, %v853
        %855 = vmatmul.bf16.gmra.mxu0 %v520
        %v856 = vpop.f32.mrf.mxu0
        %v857 = vadd.f32 %v561, %v856
        %v858 = vpop.f32.mrf.mxu0
        %v859 = vadd.f32 %v561, %v858
        %860 = vmatmul.bf16.gmra.mxu0 %v522
        %v861 = vpop.f32.mrf.mxu0
        %v862 = vadd.f32 %v561, %v861
        %v863 = vpop.f32.mrf.mxu0
        %v864 = vadd.f32 %v561, %v863
        %865 = vmatmul.bf16.gmra.mxu0 %v524
        %v866 = vpop.f32.mrf.mxu0
        %v867 = vadd.f32 %v561, %v866
        %v868 = vpop.f32.mrf.mxu0
        %v869 = vadd.f32 %v561, %v868
        %870 = vdwg.mxu0
        %871 = vmatpush.bf16.msra.mxu0 %v691
        %872 = vmatpush.bf16.msra.mxu0 %v689
        %873 = vmatpush.bf16.msra.mxu0 %v687
        %874 = vmatpush.bf16.msra.mxu0 %v685
        %875 = vmatpush.bf16.msra.mxu0 %v683
        %876 = vmatpush.bf16.msra.mxu0 %v681
        %877 = vmatpush.bf16.msra.mxu0 %v679
        %878 = vmatpush.bf16.msra.mxu0 %v677
        %879 = vmatmul.bf16.gmra.mxu0 %v511
        %v880 = vpop.f32.mrf.mxu0
        %v881 = vadd.f32 %v832, %v880
        %v882 = vpop.f32.mrf.mxu0
        %v883 = vadd.f32 %v834, %v882
        %884 = vmatmul.bf16.gmra.mxu0 %v513
        %v885 = vpop.f32.mrf.mxu0
        %v886 = vadd.f32 %v837, %v885
        %v887 = vpop.f32.mrf.mxu0
        %v888 = vadd.f32 %v839, %v887
        %889 = vmatmul.bf16.gmra.mxu0 %v515
        %v890 = vpop.f32.mrf.mxu0
        %v891 = vadd.f32 %v842, %v890
        %v892 = vpop.f32.mrf.mxu0
        %v893 = vadd.f32 %v844, %v892
        %894 = vmatmul.bf16.gmra.mxu0 %v517
        %v895 = vpop.f32.mrf.mxu0
        %v896 = vadd.f32 %v847, %v895
        %v897 = vpop.f32.mrf.mxu0
        %v898 = vadd.f32 %v849, %v897
        %899 = vmatmul.bf16.gmra.mxu0 %v519
        %v900 = vpop.f32.mrf.mxu0
        %v901 = vadd.f32 %v852, %v900
        %v902 = vpop.f32.mrf.mxu0
        %v903 = vadd.f32 %v854, %v902
        %904 = vmatmul.bf16.gmra.mxu0 %v521
        %v905 = vpop.f32.mrf.mxu0
        %v906 = vadd.f32 %v857, %v905
        %v907 = vpop.f32.mrf.mxu0
        %v908 = vadd.f32 %v859, %v907
        %909 = vmatmul.bf16.gmra.mxu0 %v523
        %v910 = vpop.f32.mrf.mxu0
        %v911 = vadd.f32 %v862, %v910
        %v912 = vpop.f32.mrf.mxu0
        %v913 = vadd.f32 %v864, %v912
        %914 = vmatmul.bf16.gmra.mxu0 %v525
        %v915 = vpop.f32.mrf.mxu0
        %v916 = vadd.f32 %v867, %v915
        %v917 = vpop.f32.mrf.mxu0
        %v918 = vadd.f32 %v869, %v917
        %919 = vdwg.mxu0
        %v920 = vmax.f32 %v783, 0.0
        %v921 = vmax.f32 %v881, 0.0
        %v922 = vmax.f32 %v785, 0.0
        %v923 = vmax.f32 %v883, 0.0
        %v924 = vmax.f32 %v788, 0.0
        %v925 = vmax.f32 %v886, 0.0
        %v926 = vmax.f32 %v790, 0.0
        %v927 = vmax.f32 %v888, 0.0
        %v928 = vmax.f32 %v793, 0.0
        %v929 = vmax.f32 %v891, 0.0
        %v930 = vmax.f32 %v795, 0.0
        %v931 = vmax.f32 %v893, 0.0
        %v932 = vmax.f32 %v798, 0.0
        %v933 = vmax.f32 %v896, 0.0
        %v934 = vmax.f32 %v800, 0.0
        %v935 = vmax.f32 %v898, 0.0
        %v936 = vmax.f32 %v803, 0.0
        %v937 = vmax.f32 %v901, 0.0
        %v938 = vmax.f32 %v805, 0.0
        %v939 = vmax.f32 %v903, 0.0
        %v940 = vmax.f32 %v808, 0.0
        %v941 = vmax.f32 %v906, 0.0
        %v942 = vmax.f32 %v810, 0.0
        %v943 = vmax.f32 %v908, 0.0
        %v944 = vmax.f32 %v813, 0.0
        %v945 = vmax.f32 %v911, 0.0
        %v946 = vmax.f32 %v815, 0.0
        %v947 = vmax.f32 %v913, 0.0
        %v948 = vmax.f32 %v818, 0.0
        %v949 = vmax.f32 %v916, 0.0
        %v950 = vmax.f32 %v820, 0.0
        %v951 = vmax.f32 %v918, 0.0
        %v952 = vpack.c.bf16 %v922, %v920
        %v953 = vpack.c.bf16 %v923, %v921
        %v954 = vpack.c.bf16 %v926, %v924
        %v955 = vpack.c.bf16 %v927, %v925
        %v956 = vpack.c.bf16 %v930, %v928
        %v957 = vpack.c.bf16 %v931, %v929
        %v958 = vpack.c.bf16 %v934, %v932
        %v959 = vpack.c.bf16 %v935, %v933
        %v960 = vpack.c.bf16 %v938, %v936
        %v961 = vpack.c.bf16 %v939, %v937
        %v962 = vpack.c.bf16 %v942, %v940
        %v963 = vpack.c.bf16 %v943, %v941
        %v964 = vpack.c.bf16 %v946, %v944
        %v965 = vpack.c.bf16 %v947, %v945
        %v966 = vpack.c.bf16 %v950, %v948
        %v967 = vpack.c.bf16 %v951, %v949
        %v968 = vld [vmem:[%s5] sm:$0xf]
        %v969 = vld [vmem:[%s5 + $0x4] sm:$0xf]
        %v970 = vld [vmem:[%s5 + $0x8] sm:$0xf]
        %v971 = vld [vmem:[%s5 + $0xc] sm:$0xf]
        %v972 = vld [vmem:[%s5 + $0x10] sm:$0xf]
        %v973 = vld [vmem:[%s5 + $0x14] sm:$0xf]
        %v974 = vld [vmem:[%s5 + $0x18] sm:$0xf]
        %v975 = vld [vmem:[%s5 + $0x1c] sm:$0xf]
        %v976 = vld [vmem:[%s5 + $0x20] sm:$0xf]
        %v977 = vld [vmem:[%s5 + $0x24] sm:$0xf]
        %v978 = vld [vmem:[%s5 + $0x28] sm:$0xf]
        %v979 = vld [vmem:[%s5 + $0x2c] sm:$0xf]
        %v980 = vld [vmem:[%s5 + $0x30] sm:$0xf]
        %v981 = vld [vmem:[%s5 + $0x34] sm:$0xf]
        %v982 = vld [vmem:[%s5 + $0x38] sm:$0xf]
        %v983 = vld [vmem:[%s5 + $0x3c] sm:$0xf]
        %v984 = vld [vmem:[%s5 + $0x40] sm:$0xf]
        %v985 = vld [vmem:[%s5 + $0x44] sm:$0xf]
        %v986 = vld [vmem:[%s5 + $0x48] sm:$0xf]
        %v987 = vld [vmem:[%s5 + $0x4c] sm:$0xf]
        %v988 = vld [vmem:[%s5 + $0x50] sm:$0xf]
        %v989 = vld [vmem:[%s5 + $0x54] sm:$0xf]
        %v990 = vld [vmem:[%s5 + $0x58] sm:$0xf]
        %v991 = vld [vmem:[%s5 + $0x5c] sm:$0xf]
        %v992 = vld [vmem:[%s5 + $0x60] sm:$0xf]
        %v993 = vld [vmem:[%s5 + $0x64] sm:$0xf]
        %v994 = vld [vmem:[%s5 + $0x68] sm:$0xf]
        %v995 = vld [vmem:[%s5 + $0x6c] sm:$0xf]
        %v996 = vld [vmem:[%s5 + $0x70] sm:$0xf]
        %v997 = vld [vmem:[%s5 + $0x74] sm:$0xf]
        %v998 = vld [vmem:[%s5 + $0x78] sm:$0xf]
        %v999 = vld [vmem:[%s5 + $0x7c] sm:$0xf]
        %v1000 = vld [vmem:[%s6] sm:$0x1]
        %v1002 = vperm.slane %v1000, 0
        %v1036 = vunpack.c.l.b16 %v968
        %v1037 = vunpack.c.l.b16 %v969
        %v1038 = vunpack.c.l.b16 %v970
        %v1039 = vunpack.c.l.b16 %v971
        %v1040 = vunpack.c.l.b16 %v972
        %v1041 = vunpack.c.l.b16 %v973
        %v1042 = vunpack.c.l.b16 %v974
        %v1043 = vunpack.c.l.b16 %v975
        %v1044 = vunpack.c.l.b16 %v976
        %v1045 = vunpack.c.l.b16 %v977
        %v1046 = vunpack.c.l.b16 %v978
        %v1047 = vunpack.c.l.b16 %v979
        %v1048 = vunpack.c.l.b16 %v980
        %v1049 = vunpack.c.l.b16 %v981
        %v1050 = vunpack.c.l.b16 %v982
        %v1051 = vunpack.c.l.b16 %v983
        %v1052 = vunpack.c.l.b16 %v984
        %v1053 = vunpack.c.l.b16 %v985
        %v1054 = vunpack.c.l.b16 %v986
        %v1055 = vunpack.c.l.b16 %v987
        %v1056 = vunpack.c.l.b16 %v988
        %v1057 = vunpack.c.l.b16 %v989
        %v1058 = vunpack.c.l.b16 %v990
        %v1059 = vunpack.c.l.b16 %v991
        %v1060 = vunpack.c.l.b16 %v992
        %v1061 = vunpack.c.l.b16 %v993
        %v1062 = vunpack.c.l.b16 %v994
        %v1063 = vunpack.c.l.b16 %v995
        %v1064 = vunpack.c.l.b16 %v996
        %v1065 = vunpack.c.l.b16 %v997
        %v1066 = vunpack.c.l.b16 %v998
        %v1067 = vunpack.c.l.b16 %v999
        %v1068 = vpack.c.b16 %v1037, %v1036
        %v1069 = vpack.c.b16 %v1039, %v1038
        %v1070 = vpack.c.b16 %v1041, %v1040
        %v1071 = vpack.c.b16 %v1043, %v1042
        %v1072 = vpack.c.b16 %v1045, %v1044
        %v1073 = vpack.c.b16 %v1047, %v1046
        %v1074 = vpack.c.b16 %v1049, %v1048
        %v1075 = vpack.c.b16 %v1051, %v1050
        %v1076 = vpack.c.b16 %v1053, %v1052
        %v1077 = vpack.c.b16 %v1055, %v1054
        %v1078 = vpack.c.b16 %v1057, %v1056
        %v1079 = vpack.c.b16 %v1059, %v1058
        %v1080 = vpack.c.b16 %v1061, %v1060
        %v1081 = vpack.c.b16 %v1063, %v1062
        %v1082 = vpack.c.b16 %v1065, %v1064
        %v1083 = vpack.c.b16 %v1067, %v1066
        %1100 = vmatpush.bf16.msra.mxu0 %v1075
        %1101 = vmatpush.bf16.msra.mxu0 %v1074
        %1102 = vmatpush.bf16.msra.mxu0 %v1073
        %1103 = vmatpush.bf16.msra.mxu0 %v1072
        %1104 = vmatpush.bf16.msra.mxu0 %v1071
        %1105 = vmatpush.bf16.msra.mxu0 %v1070
        %1106 = vmatpush.bf16.msra.mxu0 %v1069
        %1107 = vmatpush.bf16.msra.mxu0 %v1068
        %1108 = vmatmul.bf16.gmra.mxu0 %v952
        %v1109 = vpop.f32.mrf.mxu0
        %v1110 = vadd.f32 %v1002, %v1109
        %v1111 = vpop.f32.mrf.mxu0
        %v1112 = vadd.f32 %v1002, %v1111
        %1113 = vmatmul.bf16.gmra.mxu0 %v954
        %v1114 = vpop.f32.mrf.mxu0
        %v1115 = vadd.f32 %v1002, %v1114
        %v1116 = vpop.f32.mrf.mxu0
        %v1117 = vadd.f32 %v1002, %v1116
        %1118 = vmatmul.bf16.gmra.mxu0 %v956
        %v1119 = vpop.f32.mrf.mxu0
        %v1120 = vadd.f32 %v1002, %v1119
        %v1121 = vpop.f32.mrf.mxu0
        %v1122 = vadd.f32 %v1002, %v1121
        %1123 = vmatmul.bf16.gmra.mxu0 %v958
        %v1124 = vpop.f32.mrf.mxu0
        %v1125 = vadd.f32 %v1002, %v1124
        %v1126 = vpop.f32.mrf.mxu0
        %v1127 = vadd.f32 %v1002, %v1126
        %1128 = vmatmul.bf16.gmra.mxu0 %v960
        %v1129 = vpop.f32.mrf.mxu0
        %v1130 = vadd.f32 %v1002, %v1129
        %v1131 = vpop.f32.mrf.mxu0
        %v1132 = vadd.f32 %v1002, %v1131
        %1133 = vmatmul.bf16.gmra.mxu0 %v962
        %v1134 = vpop.f32.mrf.mxu0
        %v1135 = vadd.f32 %v1002, %v1134
        %v1136 = vpop.f32.mrf.mxu0
        %v1137 = vadd.f32 %v1002, %v1136
        %1138 = vmatmul.bf16.gmra.mxu0 %v964
        %v1139 = vpop.f32.mrf.mxu0
        %v1140 = vadd.f32 %v1002, %v1139
        %v1141 = vpop.f32.mrf.mxu0
        %v1142 = vadd.f32 %v1002, %v1141
        %1143 = vmatmul.bf16.gmra.mxu0 %v966
        %v1144 = vpop.f32.mrf.mxu0
        %v1145 = vadd.f32 %v1002, %v1144
        %v1146 = vpop.f32.mrf.mxu0
        %v1147 = vadd.f32 %v1002, %v1146
        %1148 = vdwg.mxu0
        %1149 = vmatpush.bf16.msra.mxu0 %v1083
        %1150 = vmatpush.bf16.msra.mxu0 %v1082
        %1151 = vmatpush.bf16.msra.mxu0 %v1081
        %1152 = vmatpush.bf16.msra.mxu0 %v1080
        %1153 = vmatpush.bf16.msra.mxu0 %v1079
        %1154 = vmatpush.bf16.msra.mxu0 %v1078
        %1155 = vmatpush.bf16.msra.mxu0 %v1077
        %1156 = vmatpush.bf16.msra.mxu0 %v1076
        %1157 = vmatmul.bf16.gmra.mxu0 %v953
        %v1158 = vpop.f32.mrf.mxu0
        %v1159 = vadd.f32 %v1110, %v1158
        %v1160 = vpop.f32.mrf.mxu0
        %v1161 = vadd.f32 %v1112, %v1160
        %1162 = vmatmul.bf16.gmra.mxu0 %v955
        %v1163 = vpop.f32.mrf.mxu0
        %v1164 = vadd.f32 %v1115, %v1163
        %v1165 = vpop.f32.mrf.mxu0
        %v1166 = vadd.f32 %v1117, %v1165
        %1167 = vmatmul.bf16.gmra.mxu0 %v957
        %v1168 = vpop.f32.mrf.mxu0
        %v1169 = vadd.f32 %v1120, %v1168
        %v1170 = vpop.f32.mrf.mxu0
        %v1171 = vadd.f32 %v1122, %v1170
        %1172 = vmatmul.bf16.gmra.mxu0 %v959
        %v1173 = vpop.f32.mrf.mxu0
        %v1174 = vadd.f32 %v1125, %v1173
        %v1175 = vpop.f32.mrf.mxu0
        %v1176 = vadd.f32 %v1127, %v1175
        %1177 = vmatmul.bf16.gmra.mxu0 %v961
        %v1178 = vpop.f32.mrf.mxu0
        %v1179 = vadd.f32 %v1130, %v1178
        %v1180 = vpop.f32.mrf.mxu0
        %v1181 = vadd.f32 %v1132, %v1180
        %1182 = vmatmul.bf16.gmra.mxu0 %v963
        %v1183 = vpop.f32.mrf.mxu0
        %v1184 = vadd.f32 %v1135, %v1183
        %v1185 = vpop.f32.mrf.mxu0
        %v1186 = vadd.f32 %v1137, %v1185
        %1187 = vmatmul.bf16.gmra.mxu0 %v965
        %v1188 = vpop.f32.mrf.mxu0
        %v1189 = vadd.f32 %v1140, %v1188
        %v1190 = vpop.f32.mrf.mxu0
        %v1191 = vadd.f32 %v1142, %v1190
        %1192 = vmatmul.bf16.gmra.mxu0 %v967
        %v1193 = vpop.f32.mrf.mxu0
        %v1194 = vadd.f32 %v1145, %v1193
        %v1195 = vpop.f32.mrf.mxu0
        %v1196 = vadd.f32 %v1147, %v1195
        %1197 = vdwg.mxu0
        %1198 = vst.msk [vmem:[%s280] sm:$0xff] %vm355, %v1159
        %1199 = vst.msk [vmem:[%s280 + $0x8] sm:$0xff] %vm355, %v1161
        %1200 = vst.msk [vmem:[%s280 + $0x10] sm:$0xff] %vm355, %v1164
        %1201 = vst.msk [vmem:[%s280 + $0x18] sm:$0xff] %vm355, %v1166
        %1202 = vst.msk [vmem:[%s280 + $0x20] sm:$0xff] %vm355, %v1169
        %1203 = vst.msk [vmem:[%s280 + $0x28] sm:$0xff] %vm355, %v1171
        %1204 = vst.msk [vmem:[%s280 + $0x30] sm:$0xff] %vm355, %v1174
        %1205 = vst.msk [vmem:[%s280 + $0x38] sm:$0xff] %vm355, %v1176
        %1206 = vst.msk [vmem:[%s280 + $0x40] sm:$0xff] %vm355, %v1179
        %1207 = vst.msk [vmem:[%s280 + $0x48] sm:$0xff] %vm355, %v1181
        %1208 = vst.msk [vmem:[%s280 + $0x50] sm:$0xff] %vm355, %v1184
        %1209 = vst.msk [vmem:[%s280 + $0x58] sm:$0xff] %vm355, %v1186
        %1210 = vst.msk [vmem:[%s280 + $0x60] sm:$0xff] %vm355, %v1189
        %1211 = vst.msk [vmem:[%s280 + $0x68] sm:$0xff] %vm355, %v1191
        %1212 = vst.msk [vmem:[%s280 + $0x70] sm:$0xff] %vm355, %v1194
        %1213 = vst.msk [vmem:[%s280 + $0x78] sm:$0xff] %vm355, %v1196
        %s1214 = sand.u32 %s178, 1
        %s1215 = sand.u32 %s178, 1
        %s1216 = smul.addr %s1215, 128
        %s1217 = scalar_lea.vmem [#allocation2], %s1216
        // Predicated region
        $region49: #{tpu_custom_call.1} parent=47 // pred_check
          %p1218 = pneg %p188
        $region50: #{tpu_custom_call.1} parent=47 // pred_check_branch
          %1220 = sbr.rel (%p1218) target = $region52
        $region51: #{tpu_custom_call.1} parent=47 // pred_region
          %s1221 = smul.u32 16, %s18
          %s1222 = ssub.s32 25, %s1221
          %p1223 = scmp.lt.s32.totalorder %s1222, 16
          %s1224 = scalar_select %p1223, %s1222, 16
          %s1225 = smul.u32 8, %s1224
          %p1226 = scmp.ne.s32.totalorder 0, %s1225
          %s1227 = smul.addr %s1221, 8
          %s1228 = scalar_lea.vmem %s7, %s1227
          // Predicated region
          $region53: #{tpu_custom_call.1} parent=51 // pred_check
            %p1229 = pneg %p1226
          $region54: #{tpu_custom_call.1} parent=51 // pred_check_branch
            %1231 = sbr.rel (%p1229) target = $region56
          $region55: #{tpu_custom_call.1} parent=51 // pred_region
            // Predicated region
            $region57: #{tpu_custom_call.1} parent=55 // pred_check
              _
            $region58: #{tpu_custom_call.1} parent=55 // pred_check_branch
              %1233 = sbr.rel (0) target = $region60
            $region59: #{tpu_custom_call.1} parent=55 // pred_region
              // Predicated region
              $region79: #{tpu_custom_call.1} parent=59 // pred_check
                _
              $region80: #{tpu_custom_call.1} parent=59 // pred_check_branch
                %1313 = sbr.rel (0) target = $region82
              $region81: #{tpu_custom_call.1} parent=59 // pred_region
                %s1314 = sshrl.u32 %s1224, 4
                // While loop
                $region83: #{tpu_custom_call.1} parent=81 // loop_pre_header
                  _
                $region84: #{tpu_custom_call.1} parent=81 // loop_header
                  %s1316 = sphi 0, %s1318
                  %p1317 = scmp.ge.s32.totalorder %s1316, %s1314
                  %s1321 = sphi 0, %s1358
                  %s1322 = sphi %s1217, %s1361
                  %s1323 = sphi %s1228, %s1362
                $region85: #{tpu_custom_call.1} parent=81 // loop_header_branch
                  %1320 = sbr.rel (%p1317) target = $region89
                $region86: #{tpu_custom_call.1} parent=81 // loop_body
                  %v1324 = vld [vmem:[%s1322] sm:$0xff]
                  %1325 = vst [vmem:[%s1323] sm:$0xff] %v1324
                  %v1326 = vld [vmem:[%s1322 + $0x8] sm:$0xff]
                  %1327 = vst [vmem:[%s1323 + $0x8] sm:$0xff] %v1326
                  %v1328 = vld [vmem:[%s1322 + $0x10] sm:$0xff]
                  %1329 = vst [vmem:[%s1323 + $0x10] sm:$0xff] %v1328
                  %v1330 = vld [vmem:[%s1322 + $0x18] sm:$0xff]
                  %1331 = vst [vmem:[%s1323 + $0x18] sm:$0xff] %v1330
                  %v1332 = vld [vmem:[%s1322 + $0x20] sm:$0xff]
                  %1333 = vst [vmem:[%s1323 + $0x20] sm:$0xff] %v1332
                  %v1334 = vld [vmem:[%s1322 + $0x28] sm:$0xff]
                  %1335 = vst [vmem:[%s1323 + $0x28] sm:$0xff] %v1334
                  %v1336 = vld [vmem:[%s1322 + $0x30] sm:$0xff]
                  %1337 = vst [vmem:[%s1323 + $0x30] sm:$0xff] %v1336
                  %v1338 = vld [vmem:[%s1322 + $0x38] sm:$0xff]
                  %1339 = vst [vmem:[%s1323 + $0x38] sm:$0xff] %v1338
                  %v1340 = vld [vmem:[%s1322 + $0x40] sm:$0xff]
                  %1341 = vst [vmem:[%s1323 + $0x40] sm:$0xff] %v1340
                  %v1342 = vld [vmem:[%s1322 + $0x48] sm:$0xff]
                  %1343 = vst [vmem:[%s1323 + $0x48] sm:$0xff] %v1342
                  %v1344 = vld [vmem:[%s1322 + $0x50] sm:$0xff]
                  %1345 = vst [vmem:[%s1323 + $0x50] sm:$0xff] %v1344
                  %v1346 = vld [vmem:[%s1322 + $0x58] sm:$0xff]
                  %1347 = vst [vmem:[%s1323 + $0x58] sm:$0xff] %v1346
                  %v1348 = vld [vmem:[%s1322 + $0x60] sm:$0xff]
                  %1349 = vst [vmem:[%s1323 + $0x60] sm:$0xff] %v1348
                  %v1350 = vld [vmem:[%s1322 + $0x68] sm:$0xff]
                  %1351 = vst [vmem:[%s1323 + $0x68] sm:$0xff] %v1350
                  %v1352 = vld [vmem:[%s1322 + $0x70] sm:$0xff]
                  %1353 = vst [vmem:[%s1323 + $0x70] sm:$0xff] %v1352
                  %v1354 = vld [vmem:[%s1322 + $0x78] sm:$0xff]
                  %1355 = vst [vmem:[%s1323 + $0x78] sm:$0xff] %v1354
                  %s1356 = sadd.s32 1, %s1321
                  %p1357 = scmp.ge.s32.totalorder %s1356, %s1314
                  %s1358 = scalar_select %p1357, 0, %s1356
                  %s1359 = smul.u32 %s1358, 128
                  %s1360 = smul.u32 %s1358, 128
                  %s1361 = scalar_lea.vmem %s1217, %s1359 [#allocation2]
                  %s1362 = scalar_lea.vmem %s1228, %s1360
                $region87: #{tpu_custom_call.1} parent=81 // loop_footer
                  %s1318 = sadd.s32 %s1316, 1
                $region88: #{tpu_custom_call.1} parent=81 // loop_footer_branch
                  %1315 = sbr.rel target = $region84
                $region89: #{tpu_custom_call.1} parent=81 // loop_exit
                  _
                %s1363 = sshrl.u32 %s1224, 4
                %s1364 = sand.u32 %s1224, 15
                %s1365 = smul.u32 %s1363, 16
                %s1366 = smul.u32 8, %s1365
                %s1367 = scalar_lea.vmem %s1217, %s1366 [#allocation2]
                %s1368 = smul.u32 8, %s1365
                %s1369 = scalar_lea.vmem %s1228, %s1368
                // While loop
                $region90: #{tpu_custom_call.1} parent=81 // loop_pre_header
                  _
                $region91: #{tpu_custom_call.1} parent=81 // loop_header
                  %s1371 = sphi 0, %s1373
                  %p1372 = scmp.ge.s32.totalorder %s1371, %s1364
                  %s1376 = sphi 0, %s1383
                  %s1377 = sphi %s1367, %s1386
                  %s1378 = sphi %s1369, %s1387
                $region92: #{tpu_custom_call.1} parent=81 // loop_header_branch
                  %1375 = sbr.rel (%p1372) target = $region96
                $region93: #{tpu_custom_call.1} parent=81 // loop_body
                  %v1379 = vld [vmem:[%s1377] sm:$0xff]
                  %1380 = vst [vmem:[%s1378] sm:$0xff] %v1379
                  %s1381 = sadd.s32 1, %s1376
                  %p1382 = scmp.ge.s32.totalorder %s1381, %s1364
                  %s1383 = scalar_select %p1382, 0, %s1381
                  %s1384 = smul.u32 %s1383, 8
                  %s1385 = smul.u32 %s1383, 8
                  %s1386 = scalar_lea.vmem %s1367, %s1384 [#allocation2]
                  %s1387 = scalar_lea.vmem %s1369, %s1385
                $region94: #{tpu_custom_call.1} parent=81 // loop_footer
                  %s1373 = sadd.s32 %s1371, 1
                $region95: #{tpu_custom_call.1} parent=81 // loop_footer_branch
                  %1370 = sbr.rel target = $region91
                $region96: #{tpu_custom_call.1} parent=81 // loop_exit
                  _
              $region82: #{tpu_custom_call.1} parent=59 // pred_fallthru
                _
              // Predicated region
              $region97: #{tpu_custom_call.1} parent=59 // pred_check
                _
              $region98: #{tpu_custom_call.1} parent=59 // pred_check_branch
                %1389 = sbr.rel target = $region100
              $region99: #{tpu_custom_call.1} parent=59 // pred_region
                _
              $region100: #{tpu_custom_call.1} parent=59 // pred_fallthru
                _
            $region60: #{tpu_custom_call.1} parent=55 // pred_fallthru
              _
            // Predicated region
            $region61: #{tpu_custom_call.1} parent=55 // pred_check
              _
            $region62: #{tpu_custom_call.1} parent=55 // pred_check_branch
              %1235 = sbr.rel target = $region64
            $region63: #{tpu_custom_call.1} parent=55 // pred_region
              %s1237 = ssub.s32 256, 1
              %s1238 = sshrl.u32 %s1224, 4
              // While loop
              $region65: #{tpu_custom_call.1} parent=63 // loop_pre_header
                _
              $region66: #{tpu_custom_call.1} parent=63 // loop_header
                %s1240 = sphi 0, %s1242
                %p1241 = scmp.ge.s32.totalorder %s1240, %s1238
                %s1245 = sphi 0, %s1282
                %s1246 = sphi %s1217, %s1285
                %s1247 = sphi %s1228, %s1286
              $region67: #{tpu_custom_call.1} parent=63 // loop_header_branch
                %1244 = sbr.rel (%p1241) target = $region71
              $region68: #{tpu_custom_call.1} parent=63 // loop_body
                %v1248 = vld [vmem:[%s1246] sm:%s1237]
                %1249 = vst [vmem:[%s1247] sm:%s1237] %v1248
                %v1250 = vld [vmem:[%s1246 + $0x8] sm:%s1237]
                %1251 = vst [vmem:[%s1247 + $0x8] sm:%s1237] %v1250
                %v1252 = vld [vmem:[%s1246 + $0x10] sm:%s1237]
                %1253 = vst [vmem:[%s1247 + $0x10] sm:%s1237] %v1252
                %v1254 = vld [vmem:[%s1246 + $0x18] sm:%s1237]
                %1255 = vst [vmem:[%s1247 + $0x18] sm:%s1237] %v1254
                %v1256 = vld [vmem:[%s1246 + $0x20] sm:%s1237]
                %1257 = vst [vmem:[%s1247 + $0x20] sm:%s1237] %v1256
                %v1258 = vld [vmem:[%s1246 + $0x28] sm:%s1237]
                %1259 = vst [vmem:[%s1247 + $0x28] sm:%s1237] %v1258
                %v1260 = vld [vmem:[%s1246 + $0x30] sm:%s1237]
                %1261 = vst [vmem:[%s1247 + $0x30] sm:%s1237] %v1260
                %v1262 = vld [vmem:[%s1246 + $0x38] sm:%s1237]
                %1263 = vst [vmem:[%s1247 + $0x38] sm:%s1237] %v1262
                %v1264 = vld [vmem:[%s1246 + $0x40] sm:%s1237]
                %1265 = vst [vmem:[%s1247 + $0x40] sm:%s1237] %v1264
                %v1266 = vld [vmem:[%s1246 + $0x48] sm:%s1237]
                %1267 = vst [vmem:[%s1247 + $0x48] sm:%s1237] %v1266
                %v1268 = vld [vmem:[%s1246 + $0x50] sm:%s1237]
                %1269 = vst [vmem:[%s1247 + $0x50] sm:%s1237] %v1268
                %v1270 = vld [vmem:[%s1246 + $0x58] sm:%s1237]
                %1271 = vst [vmem:[%s1247 + $0x58] sm:%s1237] %v1270
                %v1272 = vld [vmem:[%s1246 + $0x60] sm:%s1237]
                %1273 = vst [vmem:[%s1247 + $0x60] sm:%s1237] %v1272
                %v1274 = vld [vmem:[%s1246 + $0x68] sm:%s1237]
                %1275 = vst [vmem:[%s1247 + $0x68] sm:%s1237] %v1274
                %v1276 = vld [vmem:[%s1246 + $0x70] sm:%s1237]
                %1277 = vst [vmem:[%s1247 + $0x70] sm:%s1237] %v1276
                %v1278 = vld [vmem:[%s1246 + $0x78] sm:%s1237]
                %1279 = vst [vmem:[%s1247 + $0x78] sm:%s1237] %v1278
                %s1280 = sadd.s32 1, %s1245
                %p1281 = scmp.ge.s32.totalorder %s1280, %s1238
                %s1282 = scalar_select %p1281, 0, %s1280
                %s1283 = smul.u32 %s1282, 128
                %s1284 = smul.u32 %s1282, 128
                %s1285 = scalar_lea.vmem %s1217, %s1283 [#allocation2]
                %s1286 = scalar_lea.vmem %s1228, %s1284
              $region69: #{tpu_custom_call.1} parent=63 // loop_footer
                %s1242 = sadd.s32 %s1240, 1
              $region70: #{tpu_custom_call.1} parent=63 // loop_footer_branch
                %1239 = sbr.rel target = $region66
              $region71: #{tpu_custom_call.1} parent=63 // loop_exit
                _
              %s1287 = sshrl.u32 %s1224, 4
              %s1288 = sand.u32 %s1224, 15
              %s1289 = smul.u32 %s1287, 16
              %s1290 = smul.u32 8, %s1289
              %s1291 = scalar_lea.vmem %s1217, %s1290 [#allocation2]
              %s1292 = smul.u32 8, %s1289
              %s1293 = scalar_lea.vmem %s1228, %s1292
              // While loop
              $region72: #{tpu_custom_call.1} parent=63 // loop_pre_header
                _
              $region73: #{tpu_custom_call.1} parent=63 // loop_header
                %s1295 = sphi 0, %s1297
                %p1296 = scmp.ge.s32.totalorder %s1295, %s1288
                %s1300 = sphi 0, %s1307
                %s1301 = sphi %s1291, %s1310
                %s1302 = sphi %s1293, %s1311
              $region74: #{tpu_custom_call.1} parent=63 // loop_header_branch
                %1299 = sbr.rel (%p1296) target = $region78
              $region75: #{tpu_custom_call.1} parent=63 // loop_body
                %v1303 = vld [vmem:[%s1301] sm:%s1237]
                %1304 = vst [vmem:[%s1302] sm:%s1237] %v1303
                %s1305 = sadd.s32 1, %s1300
                %p1306 = scmp.ge.s32.totalorder %s1305, %s1288
                %s1307 = scalar_select %p1306, 0, %s1305
                %s1308 = smul.u32 %s1307, 8
                %s1309 = smul.u32 %s1307, 8
                %s1310 = scalar_lea.vmem %s1291, %s1308 [#allocation2]
                %s1311 = scalar_lea.vmem %s1293, %s1309
              $region76: #{tpu_custom_call.1} parent=63 // loop_footer
                %s1297 = sadd.s32 %s1295, 1
              $region77: #{tpu_custom_call.1} parent=63 // loop_footer_branch
                %1294 = sbr.rel target = $region73
              $region78: #{tpu_custom_call.1} parent=63 // loop_exit
                _
            $region64: #{tpu_custom_call.1} parent=55 // pred_fallthru
              _
          $region56: #{tpu_custom_call.1} parent=51 // pred_fallthru
            _
          %1390 = vnop
        $region52: #{tpu_custom_call.1} parent=47 // pred_fallthru
          _
      $region48: #{tpu_custom_call.1} parent=5 // pred_fallthru
        _
      %p1391 = scmp.le.s32.totalorder 2, %s13
      // Predicated region
      $region101: #{tpu_custom_call.1} parent=5 // pred_check
        %p1392 = pneg %p1391
      $region102: #{tpu_custom_call.1} parent=5 // pred_check_branch
        %1394 = sbr.rel (%p1392) target = $region104
      $region103: #{tpu_custom_call.1} parent=5 // pred_region
        %s1395 = ssub.s32 %s13, 2
        // Predicated region
        $region105: #{tpu_custom_call.1} parent=103 // pred_check
          %p1396 = pneg %p194
        $region106: #{tpu_custom_call.1} parent=103 // pred_check_branch
          %1398 = sbr.rel (%p1396) target = $region108
        $region107: #{tpu_custom_call.1} parent=103 // pred_region
          %s1399 = sand.u32 %s179, 1
          %s1400 = sand.u32 %s179, 1
          %s1401 = smul.addr %s1400, 128
          %s1402 = scalar_lea.vmem [#allocation2], %s1401
        $region108: #{tpu_custom_call.1} parent=103 // pred_fallthru
          _
      $region104: #{tpu_custom_call.1} parent=5 // pred_fallthru
        _
    $region6: #{tpu_custom_call.1} parent=1 // loop_footer
      %s17 = sadd.s32 1, %s13
    $region7: #{tpu_custom_call.1} parent=1 // loop_footer_branch
      %12 = sbr.rel target = $region3
    $region8: #{tpu_custom_call.1} parent=1 // loop_exit
      _

</llo_original>
